<compile_context>
chip_gen: v6e
topology: v6e:2x2x1
jax: 0.10.0
libtpu: 0.0.40
codegen_flags: <defaults>
</compile_context>

<pallas_src>
import math

import jax
import jax.numpy as jnp
from jax.experimental import pallas as pl
from jax.experimental.pallas import tpu as pltpu


def _triple(v):
    if isinstance(v, (tuple, list)):
        assert len(v) == 3
        return tuple(int(x) for x in v)
    return (int(v),) * 3


def _cdiv(a, b):
    return -(-a // b)


def _round_up(a, b):
    return _cdiv(a, b) * b


def _vmem_block_bytes(shape, itemsize):
    """Approx VMEM footprint of a block, including (sublane, lane) padding."""
    sub = 16 if itemsize == 2 else (32 if itemsize == 1 else 8)
    lead = 1
    for d in shape[:-2]:
        lead *= int(d)
    return lead * _round_up(int(shape[-2]), sub) * _round_up(int(shape[-1]), 128) * itemsize


def _select_tiles(*, M2, Ogp, Kc, kd, T, sh, swt, halo, csize, osize,
                  need_scratch, budget, out_tile=None, row_tile=None):
    """Pick (TM, TN, weight_full_slab) so blocks fit the VMEM budget."""
    tn_max = Ogp if out_tile is None else min(Ogp, _round_up(int(out_tile), 128))
    tn_cands = [d for d in range(tn_max, 127, -128) if Ogp % d == 0] or [128]

    tm_base = _round_up(M2, 8)
    caps = ((int(row_tile),) if row_tile else ()) + (2048, 1024, 512, 256, 128, 64, 32, 16, 8)
    tm_cands = []
    for v in caps:
        t = min(tm_base, _round_up(v, 8))
        if t not in tm_cands:
            tm_cands.append(t)
    tm_cands.sort(reverse=True)

    def usage(tm, tn):
        tmh = _round_up(tm + halo, 8)
        in_b = 2 * _vmem_block_bytes((sh * swt, tmh, Kc), csize)
        w_full = _vmem_block_bytes((kd * T, Kc, tn), csize)
        # count the full slab conservatively at 2x even though we request
        # Buffered(1) -- keeps us safe if single-buffering is ignored.
        full = (2 * w_full <= 0.4 * budget) or kd == 1
        w_b = 2 * w_full if full else 2 * _vmem_block_bytes((T, Kc, tn), csize)
        out_b = 2 * _vmem_block_bytes((tm, tn), osize)
        acc_b = _vmem_block_bytes((tm, tn), 4) if need_scratch else 0
        bias_b = 2 * _vmem_block_bytes((1, tn), 4)
        return in_b + w_b + out_b + acc_b + bias_b, full

    for min_tm in (min(tm_base, 512), min(tm_base, 128), 8):
        for tn in tn_cands:        # prefer large TN (small J -> less input re-read)
            for tm in tm_cands:    # then large TM (less halo / per-step overhead)
                if tm < min_tm:
                    continue
                tot, full = usage(tm, tn)
                if tot <= budget:
                    return tm, tn, full
    tm = 8
    _, full = usage(tm, 128)
    return tm, 128, full


# ----------------------------- Pallas kernel ---------------------------------

def _make_conv3d_kernel(kd, kh, kwt, sh, swt, dh, dw, wrow, TM,
                        w_full_slab, use_scratch):
    """Implicit-GEMM conv kernel for one (g, j, n, do, row-tile, kid) program.

    Refs:
      x_ref  : (sh, swt, TMH, Kc)     stride-phase-split row tile (+ tap halo)
      w_ref  : (kd*T, Kc, TN) if w_full_slab else (T, Kc, TN)
      b_ref  : (1, TN)                fp32 bias row
      o_ref  : (TM, TN)               output rows (lane-dense channels)
      scratch: optional (TM, TN) fp32 accumulator (only for non-fp32 outputs)
    """
    T = kh * kwt

    def kernel(x_ref, w_ref, b_ref, o_ref, *scratch):
        kid = pl.program_id(5)          # kernel-depth tap (reduction axis)

        # Sum of the kh*kwt shifted-window matmuls for this depth tap, kept in
        # registers/local fp32 -> a single accumulator RMW per grid step.
        acc = None
        for ih in range(kh):
            rh = (ih * dh) % sh
            qh0 = (ih * dh) // sh
            for it in range(kwt):
                rw = (it * dw) % swt
                qw0 = (it * dw) // swt
                start = qh0 * wrow + qw0                  # static tap offset
                xs = x_ref[rh, rw, pl.ds(start, TM), :]   # (TM, Kc)
                tap = ih * kwt + it
                if w_full_slab and kd > 1:
                    wk = w_ref[kid * T + tap]             # (Kc, TN)
                else:
                    wk = w_ref[tap]                       # (Kc, TN)
                d = jnp.dot(xs, wk, preferred_element_type=jnp.float32)
                acc = d if acc is None else acc + d

        if kd == 1:                                       # no reduction axis
            o_ref[...] = (acc + b_ref[...]).astype(o_ref.dtype)
            return

        acc_ref = scratch[0] if use_scratch else o_ref    # fp32 either way

        @pl.when(kid == 0)
        def _():
            acc_ref[...] = acc + b_ref[...]               # bias folded in once

        @pl.when(kid > 0)
        def _():
            acc_ref[...] = acc_ref[...] + acc

        if use_scratch:
            @pl.when(kid == kd - 1)
            def _():
                o_ref[...] = acc_ref[...].astype(o_ref.dtype)

    return kernel


# ------------------------- fused conv3d forward -------------------------------

def conv3d_pallas(x, weight_flat, bias, *, kernel_size, stride, dilation, pads,
                  groups, compute_dtype=None, out_tile=None, row_tile=None,
                  fold_w=None, channels_last_out=False):
    """x: (N, Cin, D, H, W); weight_flat: (Cout, Cin//g * kd*kh*kw)."""
    N, Cin, D, H, W = x.shape
    kd, kh, kw = kernel_size
    sd, sh, sw = stride
    dd, dh, dw = dilation
    (pd0, pd1), (ph0, ph1), (pw0, pw1) = pads
    G = int(groups)
    Cg = Cin // G
    Cout = weight_flat.shape[0]
    Og = Cout // G

    Dp, Hp, Wp = D + pd0 + pd1, H + ph0 + ph1, W + pw0 + pw1
    Do = (Dp - dd * (kd - 1) - 1) // sd + 1
    Ho = (Hp - dh * (kh - 1) - 1) // sh + 1
    Wo = (Wp - dw * (kw - 1) - 1) // sw + 1
    assert Do > 0 and Ho > 0 and Wo > 0

    cdt = jnp.dtype(compute_dtype) if compute_dtype is not None else jnp.dtype(x.dtype)
    odt = jnp.dtype(x.dtype)
    csize, osize = cdt.itemsize, odt.itemsize

    if fold_w is None:
        # Small per-group channel count starves the MXU K dim -> fold the kw
        # taps into the contraction (partial im2col along W in the wrapper).
        fold_w = (Cg < 128) and (kw > 1)

    # H stride-phase decomposition (both paths): x[qh*sh + rh] -> phase rh,
    # so every strided/dilated H window is a contiguous row slice in-kernel.
    Hq = _cdiv(Hp, sh)
    Hpp = Hq * sh

    if fold_w:
        kwt, swt = 1, 1
        wrow, Kc = Wo, kw * Cg
    else:
        kwt, swt = kw, sw
        Wq = _cdiv(Wp, sw)
        Wpp = Wq * sw
        wrow, Kc = Wq, Cg

    M2 = Ho * wrow
    halo = ((kh - 1) * dh // sh) * wrow + ((kwt - 1) * dw) // swt
    Ogp = _round_up(Og, 128)                      # lane-dense output channels
    need_scratch = (odt != jnp.dtype(jnp.float32)) and (kd > 1)
    T = kh * kwt                                  # taps handled per depth step

    # ---- generation-aware VMEM budget ----------------------------------
    try:
        vmem_cap = int(pltpu.get_tpu_info().vmem_capacity_bytes)
    except Exception:
        vmem_cap = 64 * 1024 * 1024               # conservative (v7x-sized)
    budget = int(vmem_cap * 0.60)
    vmem_limit = int(vmem_cap * 0.80)

    TM, TN, w_full_slab = _select_tiles(
        M2=M2, Ogp=Ogp, Kc=Kc, kd=kd, T=T, sh=sh, swt=swt, halo=halo,
        csize=csize, osize=osize, need_scratch=need_scratch, budget=budget,
        out_tile=out_tile, row_tile=row_tile)

    NM = _cdiv(M2, TM)
    M2p = NM * TM
    TMH = _round_up(TM + halo, 8)
    J = Ogp // TN

    # ---- input prep: channels-last, pad, phase split, flatten, row-tile -----
    xg = x.reshape(N, G, Cg, D, H, W).astype(cdt)
    xg = jnp.pad(xg, ((0, 0), (0, 0), (0, 0),
                      (pd0, pd1), (ph0, ph1 + (Hpp - Hp)), (pw0, pw1)))
    if fold_w:
        xg = xg.reshape(N, G, Cg, Dp, Hq, sh, Wp)
        taps = [xg[..., iw * dw: iw * dw + (Wo - 1) * sw + 1: sw]
                for iw in range(kw)]
        assert all(t.shape[-1] == Wo for t in taps)
        xg = jnp.stack(taps, axis=-1)                 # (N,G,Cg,Dp,Hq,sh,Wo,kw)
        xg = xg.transpose(1, 0, 3, 5, 4, 6, 7, 2)     # (G,N,Dp,sh,Hq,Wo,kw,Cg)
        xg = xg.reshape(G, N, Dp, sh, 1, Hq * Wo, kw * Cg)
    else:
        xg = jnp.pad(xg, ((0, 0),) * 5 + ((0, Wpp - Wp),))
        xg = xg.reshape(N, G, Cg, Dp, Hq, sh, Wq, sw)
        xg = xg.transpose(1, 0, 3, 5, 7, 4, 6, 2)     # (G,N,Dp,sh,sw,Hq,Wq,Cg)
        xg = xg.reshape(G, N, Dp, sh, sw, Hq * Wq, Cg)

    Lrow = xg.shape[-2]
    Lneed = (NM - 1) * TM + TMH
    if Lneed > Lrow:                                  # zero tail for tap halos
        xg = jnp.pad(xg, ((0, 0),) * 5 + ((0, Lneed - Lrow), (0, 0)))
    # Overlapping row tiles (wrapper-side halo duplication keeps the kernel's
    # BlockSpec purely Blocked/Squeezed while the out/acc block is only TM rows)
    xt = jnp.stack([xg[..., i * TM:i * TM + TMH, :] for i in range(NM)], axis=-3)
    # xt: (G, N, Dp, sh, swt, NM, TMH, Kc)

    # ---- weight prep: (Cout, Cg*kd*kh*kw) -> (G, kd*T, Kc, Ogp) --------------
    wg = weight_flat.reshape(G, Og, Cg, kd, kh, kw).astype(cdt)
    wg = wg.transpose(0, 3, 4, 5, 2, 1)               # (G, kd, kh, kw, Cg, Og)
    if fold_w:
        wg = wg.reshape(G, kd, kh, kw * Cg, Og)       # K ordered (kw, Cg)
    else:
        wg = wg.reshape(G, kd, kh * kw, Cg, Og)
    if Ogp > Og:
        wg = jnp.pad(wg, ((0, 0),) * (wg.ndim - 1) + ((0, Ogp - Og),))
    wg = wg.reshape(G, kd * T, Kc, Ogp) if w_full_slab else wg.reshape(G, kd, T, Kc, Ogp)

    if bias is None:
        bvec = jnp.zeros((G, 1, Ogp), jnp.float32)
    else:
        bvec = bias.astype(jnp.float32).reshape(G, 1, Og)
        if Ogp > Og:
            bvec = jnp.pad(bvec, ((0, 0), (0, 0), (0, Ogp - Og)))

    # ---- specs ---------------------------------------------------------------
    kernel = _make_conv3d_kernel(kd, kh, kwt, sh, swt, dh, dw, wrow, TM,
                                 w_full_slab, need_scratch)

    def x_index(g, j, n, do, m, k):
        return (g, n, do * sd + k * dd, 0, 0, m, 0, 0)

    if w_full_slab:
        w_block = (None, kd * T, Kc, TN)
        w_index = lambda g, j, n, do, m, k: (g, 0, 0, j)
        try:
            # constant block index across n/do/m/k -> single buffer is enough
            w_spec = pl.BlockSpec(w_block, w_index, pipeline_mode=pl.Buffered(1))
        except (AttributeError, TypeError):
            w_spec = pl.BlockSpec(w_block, w_index)
    else:
        # k-sliced weight: only the current depth tap's (T, Kc, TN) is resident
        w_spec = pl.BlockSpec((None, None, T, Kc, TN),
                              lambda g, j, n, do, m, k: (g, k, 0, 0, j))

    scratch_shapes = (pltpu.VMEM((TM, TN), jnp.float32),) if need_scratch else ()

    flops = 2 * G * N * Do * M2p * Ogp * Kc * kd * T
    bytes_accessed = (int(xt.size) * csize * kd * J
                      + int(wg.size) * csize
                      + G * N * Do * M2p * Ogp * osize)

    # TODO(synk): block multiple Do outputs per grid step (or a rolling depth
    # ring buffer for stride_d=1) to cut the per-step overhead / input re-reads
    # further on tiny planes and bandwidth-bound v5e.
    out = pl.pallas_call(
        kernel,
        out_shape=jax.ShapeDtypeStruct((G, N, Do, M2p, Ogp), odt),
        grid_spec=pltpu.PrefetchScalarGridSpec(
            num_scalar_prefetch=0,
            grid=(G, J, N, Do, NM, kd),
            in_specs=[
                pl.BlockSpec((None, None, None, sh, swt, None, TMH, Kc), x_index),
                w_spec,
                pl.BlockSpec((None, 1, TN), lambda g, j, n, do, m, k: (g, 0, j)),
            ],
            out_specs=pl.BlockSpec((None, None, None, TM, TN),
                                   lambda g, j, n, do, m, k: (g, n, do, m, j)),
            scratch_shapes=scratch_shapes,
        ),
        compiler_params=pltpu.CompilerParams(
            dimension_semantics=("parallel",) * 5 + ("arbitrary",),
            vmem_limit_bytes=vmem_limit,
        ),
        cost_estimate=pl.CostEstimate(flops=flops, transcendentals=0,
                                      bytes_accessed=bytes_accessed),
    )(xt, wg, bvec)

    # drop row-tile / halo / channel padding and restore the requested layout
    out = out[:, :, :, :M2, :Og]
    if fold_w:
        out = out.reshape(G, N, Do, Ho, Wo, Og)
    else:
        out = out.reshape(G, N, Do, Ho, wrow, Og)[:, :, :, :, :Wo, :]
    if channels_last_out:
        return out.transpose(1, 2, 3, 4, 0, 5).reshape(N, Do, Ho, Wo, G * Og)
    out = out.transpose(1, 0, 5, 2, 3, 4).reshape(N, G * Og, Do, Ho, Wo)
    return out


# ------------------------------ Conv3d module ---------------------------------

class Conv3dPallas:
    """Mirrors the bnnp Conv3d: flat weight (O, Cin/g * prod(k)), normal init
    std=0.5/sqrt(fan_in), zero bias.  NCDHW in / NCDHW out."""

    def __init__(self, in_channels, out_channels, kernel_size, stride=1,
                 padding=0, dilation=1, groups=1, bias=True,
                 padding_mode="zeros", *, key, dtype=jnp.float32,
                 compute_dtype=None):
        if groups <= 0:
            raise ValueError("groups must be a positive integer")
        if in_channels % groups != 0 or out_channels % groups != 0:
            raise ValueError("channels must be divisible by groups")
        if padding_mode != "zeros":
            # TODO(synk): reflect/replicate/circular padding modes not implemented.
            raise NotImplementedError("only padding_mode='zeros' supported")
        self.in_channels = in_channels
        self.out_channels = out_channels
        self.kernel_size = _triple(kernel_size)
        self.stride = _triple(stride)
        self.dilation = _triple(dilation)
        self.groups = groups
        # Set compute_dtype=jnp.bfloat16 on v6e/v7x for the native MXU path
        # (fp32 accumulation and fp32 bias are kept either way).
        self.compute_dtype = compute_dtype

        if isinstance(padding, str):
            if padding not in ("same", "valid"):
                raise ValueError(f"Invalid padding string {padding!r}")
            if padding == "same" and any(s != 1 for s in self.stride):
                raise ValueError("padding='same' requires stride=1")
            if padding == "valid":
                self.pads = ((0, 0),) * 3
            else:
                pads = []
                for d, k in zip(self.dilation, self.kernel_size):
                    total = d * (k - 1)
                    left = total // 2
                    pads.append((left, total - left))
                self.pads = tuple(pads)
        else:
            p = _triple(padding)
            self.pads = tuple((pi, pi) for pi in p)

        fan_in = in_channels // groups * math.prod(self.kernel_size)
        self.weight = (0.5 / math.sqrt(fan_in)) * jax.random.normal(
            key, (out_channels, fan_in), dtype=dtype)     # flat, like the module
        self.bias = jnp.zeros((out_channels,), dtype=dtype) if bias else None

    def __call__(self, x):
        return conv3d_pallas(
            x, self.weight, self.bias,
            kernel_size=self.kernel_size, stride=self.stride,
            dilation=self.dilation, pads=self.pads, groups=self.groups,
            compute_dtype=self.compute_dtype)


# ---------------------------------- main ---------------------------------------

if __name__ == "__main__":
    root = jax.random.PRNGKey(0)
    kw1, kx1, kb1, kw2, kx2, kw3, kx3, kb3 = jax.random.split(root, 8)

    # ---- Test 1: stride 1, dilation 1, groups 1, bias (small Cg -> kw-folded K)
    N, Cin, D, H, W = 2, 4, 8, 8, 8
    Cout, ks, pad = 8, 3, 1
    conv1 = Conv3dPallas(Cin, Cout, ks, stride=1, padding=pad, key=kw1)
    conv1.bias = 0.1 * jax.random.normal(kb1, (Cout,), jnp.float32)
    x1 = jax.random.normal(kx1, (N, Cin, D, H, W), dtype=jnp.float32)

    y1 = jax.block_until_ready(conv1(x1))
    assert y1.shape == (N, Cout, D, H, W), y1.shape
    w1 = conv1.weight.reshape(Cout, Cin, ks, ks, ks)
    y1_ref = jax.lax.conv_general_dilated(
        x1, w1, window_strides=(1, 1, 1), padding=[(pad, pad)] * 3,
        dimension_numbers=("NCDHW", "OIDHW", "NCDHW"),
        precision=jax.lax.Precision.HIGHEST,
    ) + conv1.bias.reshape(1, Cout, 1, 1, 1)
    err1 = float(jnp.max(jnp.abs(y1 - y1_ref)))
    assert err1 < 1e-4, err1

    # ---- Test 2: stride 2, dilation 2, groups 2, odd spatial, no bias --------
    N2, Cin2, D2, H2, W2 = 2, 4, 9, 9, 9
    Cout2, ks2, pad2, st2, dl2, g2 = 8, 3, 2, 2, 2, 2
    conv2 = Conv3dPallas(Cin2, Cout2, ks2, stride=st2, padding=pad2,
                         dilation=dl2, groups=g2, bias=False, key=kw2)
    x2 = jax.random.normal(kx2, (N2, Cin2, D2, H2, W2), dtype=jnp.float32)
    y2 = jax.block_until_ready(conv2(x2))
    w2 = conv2.weight.reshape(Cout2, Cin2 // g2, ks2, ks2, ks2)
    y2_ref = jax.lax.conv_general_dilated(
        x2, w2, window_strides=(st2,) * 3, padding=[(pad2, pad2)] * 3,
        rhs_dilation=(dl2,) * 3, feature_group_count=g2,
        dimension_numbers=("NCDHW", "OIDHW", "NCDHW"),
        precision=jax.lax.Precision.HIGHEST,
    )
    assert y2.shape == y2_ref.shape, (y2.shape, y2_ref.shape)
    err2 = float(jnp.max(jnp.abs(y2 - y2_ref)))
    assert err2 < 1e-4, err2

    # ---- Test 3: wide channels (un-folded path), bf16 compute, fp32 output ---
    N3, Cin3, D3, H3, W3 = 1, 128, 4, 8, 8
    Cout3, ks3, pad3 = 256, 3, 1
    conv3 = Conv3dPallas(Cin3, Cout3, ks3, stride=1, padding=pad3, key=kw3,
                         compute_dtype=jnp.bfloat16)
    conv3.bias = 0.1 * jax.random.normal(kb3, (Cout3,), jnp.float32)
    x3 = jax.random.normal(kx3, (N3, Cin3, D3, H3, W3), dtype=jnp.float32)
    y3 = jax.block_until_ready(conv3(x3))
    w3 = conv3.weight.reshape(Cout3, Cin3, ks3, ks3, ks3)
    y3_ref = jax.lax.conv_general_dilated(
        x3, w3, window_strides=(1, 1, 1), padding=[(pad3, pad3)] * 3,
        dimension_numbers=("NCDHW", "OIDHW", "NCDHW"),
        precision=jax.lax.Precision.HIGHEST,
    ) + conv3.bias.reshape(1, Cout3, 1, 1, 1)
    err3 = float(jnp.max(jnp.abs(y3 - y3_ref)))
    assert err3 < 5e-2, err3

    # ---- Test 4: bf16 input end-to-end (exercises the fp32-scratch path) -----
    y4 = jax.block_until_ready(conv1(x1.astype(jnp.bfloat16)))
    assert y4.dtype == jnp.bfloat16 and y4.shape == y1.shape
    err4 = float(jnp.max(jnp.abs(y4.astype(jnp.float32) - y1_ref)))
    assert err4 < 8e-2, err4

    print("KERNEL_OK")
</pallas_src>

<mosaic_0001>
module attributes {stable_mosaic.version = 11 : i64} {
  func.func @kernel(%arg0: i32, %arg1: i32, %arg2: i32, %arg3: i32, %arg4: i32, %arg5: i32, %arg6: memref<1x1x1x1x1x1x80x12xf32, #tpu.memory_space<vmem>>, %arg7: memref<1x9x12x128xf32, #tpu.memory_space<vmem>>, %arg8: memref<1x1x128xf32, #tpu.memory_space<vmem>>, %arg9: memref<1x1x1x64x128xf32, #tpu.memory_space<vmem>>) attributes {dimension_semantics = [#tpu.dimension_semantics<parallel>, #tpu.dimension_semantics<parallel>, #tpu.dimension_semantics<parallel>, #tpu.dimension_semantics<parallel>, #tpu.dimension_semantics<parallel>, #tpu.dimension_semantics<arbitrary>], iteration_bounds = array<i64: 1, 1, 2, 8, 1, 3>, scalar_prefetch = 0 : i64, scratch_operands = 0 : i64, tpu.core_type = #tpu.core_type<tc>, window_params = [{transform_indices = @transform_0, window_bounds = array<i64: 1, 1, 1, 1, 1, 1, 80, 12>}, {pipeline_mode = #tpu.pipeline_mode<synchronous>, transform_indices = @transform_1, window_bounds = array<i64: 1, 9, 12, 128>}, {transform_indices = @transform_2, window_bounds = array<i64: 1, 1, 128>}, {transform_indices = @transform_3, window_bounds = array<i64: 1, 1, 1, 64, 128>}]} {
    %c0 = arith.constant 0 : index
    %c0_0 = arith.constant 0 : index
    %c0_1 = arith.constant 0 : index
    %c0_2 = arith.constant 0 : index
    %c0_3 = arith.constant 0 : index
    %c0_4 = arith.constant 0 : index
    %c0_5 = arith.constant 0 : index
    %c0_6 = arith.constant 0 : index
    %0 = vector.load %arg6[%c0, %c0_0, %c0_1, %c0_2, %c0_3, %c0_4, %c0_5, %c0_6] : memref<1x1x1x1x1x1x80x12xf32, #tpu.memory_space<vmem>>, vector<1x1x1x1x1x1x64x12xf32>
    %1 = vector.shape_cast %0 : vector<1x1x1x1x1x1x64x12xf32> to vector<64x12xf32>
    %c3_i32 = arith.constant 3 : i32
    %2 = arith.muli %arg5, %c3_i32 : i32
    %c0_i32 = arith.constant 0 : i32
    %3 = arith.addi %2, %c0_i32 : i32
    %c0_7 = arith.constant 0 : index
    %4 = arith.index_cast %3 : i32 to index
    %c0_8 = arith.constant 0 : index
    %c0_9 = arith.constant 0 : index
    %5 = vector.load %arg7[%c0_7, %4, %c0_8, %c0_9] : memref<1x9x12x128xf32, #tpu.memory_space<vmem>>, vector<1x1x12x128xf32>
    %6 = vector.shape_cast %5 : vector<1x1x12x128xf32> to vector<12x128xf32>
    %cst = arith.constant dense<0.000000e+00> : vector<64x128xf32>
    %7 = tpu.matmul %1, %6, %cst {dimension_numbers = #tpu.dot_dimension_numbers<[1], [0], [0], [1], [0, 0, 1, 1], [], []>} : vector<64x12xf32>, vector<12x128xf32>, vector<64x128xf32> -> vector<64x128xf32>
    %c0_10 = arith.constant 0 : index
    %c0_11 = arith.constant 0 : index
    %c0_12 = arith.constant 0 : index
    %c0_13 = arith.constant 0 : index
    %c0_14 = arith.constant 0 : index
    %c0_15 = arith.constant 0 : index
    %c8 = arith.constant 8 : index
    %c0_16 = arith.constant 0 : index
    %8 = vector.load %arg6[%c0_10, %c0_11, %c0_12, %c0_13, %c0_14, %c0_15, %c8, %c0_16] : memref<1x1x1x1x1x1x80x12xf32, #tpu.memory_space<vmem>>, vector<1x1x1x1x1x1x64x12xf32>
    %9 = vector.shape_cast %8 : vector<1x1x1x1x1x1x64x12xf32> to vector<64x12xf32>
    %c3_i32_17 = arith.constant 3 : i32
    %10 = arith.muli %arg5, %c3_i32_17 : i32
    %c1_i32 = arith.constant 1 : i32
    %11 = arith.addi %10, %c1_i32 : i32
    %c0_18 = arith.constant 0 : index
    %12 = arith.index_cast %11 : i32 to index
    %c0_19 = arith.constant 0 : index
    %c0_20 = arith.constant 0 : index
    %13 = vector.load %arg7[%c0_18, %12, %c0_19, %c0_20] : memref<1x9x12x128xf32, #tpu.memory_space<vmem>>, vector<1x1x12x128xf32>
    %14 = vector.shape_cast %13 : vector<1x1x12x128xf32> to vector<12x128xf32>
    %cst_21 = arith.constant dense<0.000000e+00> : vector<64x128xf32>
    %15 = tpu.matmul %9, %14, %cst_21 {dimension_numbers = #tpu.dot_dimension_numbers<[1], [0], [0], [1], [0, 0, 1, 1], [], []>} : vector<64x12xf32>, vector<12x128xf32>, vector<64x128xf32> -> vector<64x128xf32>
    %16 = arith.addf %7, %15 : vector<64x128xf32>
    %c0_22 = arith.constant 0 : index
    %c0_23 = arith.constant 0 : index
    %c0_24 = arith.constant 0 : index
    %c0_25 = arith.constant 0 : index
    %c0_26 = arith.constant 0 : index
    %c0_27 = arith.constant 0 : index
    %c16 = arith.constant 16 : index
    %c0_28 = arith.constant 0 : index
    %17 = vector.load %arg6[%c0_22, %c0_23, %c0_24, %c0_25, %c0_26, %c0_27, %c16, %c0_28] : memref<1x1x1x1x1x1x80x12xf32, #tpu.memory_space<vmem>>, vector<1x1x1x1x1x1x64x12xf32>
    %18 = vector.shape_cast %17 : vector<1x1x1x1x1x1x64x12xf32> to vector<64x12xf32>
    %c3_i32_29 = arith.constant 3 : i32
    %19 = arith.muli %arg5, %c3_i32_29 : i32
    %c2_i32 = arith.constant 2 : i32
    %20 = arith.addi %19, %c2_i32 : i32
    %c0_30 = arith.constant 0 : index
    %21 = arith.index_cast %20 : i32 to index
    %c0_31 = arith.constant 0 : index
    %c0_32 = arith.constant 0 : index
    %22 = vector.load %arg7[%c0_30, %21, %c0_31, %c0_32] : memref<1x9x12x128xf32, #tpu.memory_space<vmem>>, vector<1x1x12x128xf32>
    %23 = vector.shape_cast %22 : vector<1x1x12x128xf32> to vector<12x128xf32>
    %cst_33 = arith.constant dense<0.000000e+00> : vector<64x128xf32>
    %24 = tpu.matmul %18, %23, %cst_33 {dimension_numbers = #tpu.dot_dimension_numbers<[1], [0], [0], [1], [0, 0, 1, 1], [], []>} : vector<64x12xf32>, vector<12x128xf32>, vector<64x128xf32> -> vector<64x128xf32>
    %25 = arith.addf %16, %24 : vector<64x128xf32>
    %c0_i32_34 = arith.constant 0 : i32
    %26 = arith.cmpi eq, %arg5, %c0_i32_34 : i32
    %27 = arith.extui %26 : i1 to i32
    %c0_i32_35 = arith.constant 0 : i32
    %28 = arith.cmpi ne, %27, %c0_i32_35 : i32
    scf.if %28 {
      %c0_38 = arith.constant 0 : index
      %c0_39 = arith.constant 0 : index
      %c0_40 = arith.constant 0 : index
      %32 = vector.load %arg8[%c0_38, %c0_39, %c0_40] : memref<1x1x128xf32, #tpu.memory_space<vmem>>, vector<1x1x128xf32>
      %33 = vector.shape_cast %32 : vector<1x1x128xf32> to vector<1x128xf32>
      %34 = vector.broadcast %33 : vector<1x128xf32> to vector<64x128xf32>
      %35 = arith.addf %25, %34 : vector<64x128xf32>
      %c0_41 = arith.constant 0 : index
      %c0_42 = arith.constant 0 : index
      %c0_43 = arith.constant 0 : index
      %c0_44 = arith.constant 0 : index
      %c0_45 = arith.constant 0 : index
      %36 = vector.load %arg9[%c0_41, %c0_42, %c0_43, %c0_44, %c0_45] : memref<1x1x1x64x128xf32, #tpu.memory_space<vmem>>, vector<1x1x1x64x128xf32>
      %37 = vector.shape_cast %36 : vector<1x1x1x64x128xf32> to vector<64x128xf32>
      %38 = vector.shape_cast %35 : vector<64x128xf32> to vector<1x1x1x64x128xf32>
      tpu.vector_store %arg9[%c0_41, %c0_42, %c0_43, %c0_44, %c0_45], %38 {strides = array<i32>} : memref<1x1x1x64x128xf32, #tpu.memory_space<vmem>>, vector<1x1x1x64x128xf32>,
    } else {
    }
    %c0_i32_36 = arith.constant 0 : i32
    %29 = arith.cmpi sgt, %arg5, %c0_i32_36 : i32
    %30 = arith.extui %29 : i1 to i32
    %c0_i32_37 = arith.constant 0 : i32
    %31 = arith.cmpi ne, %30, %c0_i32_37 : i32
    scf.if %31 {
      %c0_38 = arith.constant 0 : index
      %c0_39 = arith.constant 0 : index
      %c0_40 = arith.constant 0 : index
      %c0_41 = arith.constant 0 : index
      %c0_42 = arith.constant 0 : index
      %32 = vector.load %arg9[%c0_38, %c0_39, %c0_40, %c0_41, %c0_42] : memref<1x1x1x64x128xf32, #tpu.memory_space<vmem>>, vector<1x1x1x64x128xf32>
      %33 = vector.shape_cast %32 : vector<1x1x1x64x128xf32> to vector<64x128xf32>
      %34 = arith.addf %33, %25 : vector<64x128xf32>
      %c0_43 = arith.constant 0 : index
      %c0_44 = arith.constant 0 : index
      %c0_45 = arith.constant 0 : index
      %c0_46 = arith.constant 0 : index
      %c0_47 = arith.constant 0 : index
      %35 = vector.load %arg9[%c0_43, %c0_44, %c0_45, %c0_46, %c0_47] : memref<1x1x1x64x128xf32, #tpu.memory_space<vmem>>, vector<1x1x1x64x128xf32>
      %36 = vector.shape_cast %35 : vector<1x1x1x64x128xf32> to vector<64x128xf32>
      %37 = vector.shape_cast %34 : vector<64x128xf32> to vector<1x1x1x64x128xf32>
      tpu.vector_store %arg9[%c0_43, %c0_44, %c0_45, %c0_46, %c0_47], %37 {strides = array<i32>} : memref<1x1x1x64x128xf32, #tpu.memory_space<vmem>>, vector<1x1x1x64x128xf32>,
    } else {
    }
    return
  }
  func.func @transform_0(%arg0: i32, %arg1: i32, %arg2: i32, %arg3: i32, %arg4: i32, %arg5: i32) -> (i32, i32, i32, i32, i32, i32, i32, i32) {
    %c1_i32 = arith.constant 1 : i32
    %0 = arith.muli %arg3, %c1_i32 : i32
    %c1_i32_0 = arith.constant 1 : i32
    %1 = arith.muli %arg5, %c1_i32_0 : i32
    %2 = arith.addi %0, %1 : i32
    %c0_i32 = arith.constant 0 : i32
    %c0_i32_1 = arith.constant 0 : i32
    %c0_i32_2 = arith.constant 0 : i32
    %c0_i32_3 = arith.constant 0 : i32
    %c0_i32_4 = arith.constant 0 : i32
    return %arg0, %arg2, %2, %c0_i32, %c0_i32_1, %arg4, %c0_i32_2, %c0_i32_3 : i32, i32, i32, i32, i32, i32, i32, i32
  }
  func.func @transform_1(%arg0: i32, %arg1: i32, %arg2: i32, %arg3: i32, %arg4: i32, %arg5: i32) -> (i32, i32, i32, i32) {
    %c0_i32 = arith.constant 0 : i32
    %c0_i32_0 = arith.constant 0 : i32
    %c0_i32_1 = arith.constant 0 : i32
    return %arg0, %c0_i32, %c0_i32_0, %arg1 : i32, i32, i32, i32
  }
  func.func @transform_2(%arg0: i32, %arg1: i32, %arg2: i32, %arg3: i32, %arg4: i32, %arg5: i32) -> (i32, i32, i32) {
    %c0_i32 = arith.constant 0 : i32
    %c0_i32_0 = arith.constant 0 : i32
    return %arg0, %c0_i32, %arg1 : i32, i32, i32
  }
  func.func @transform_3(%arg0: i32, %arg1: i32, %arg2: i32, %arg3: i32, %arg4: i32, %arg5: i32) -> (i32, i32, i32, i32, i32) {
    %c0_i32 = arith.constant 0 : i32
    return %arg0, %arg2, %arg3, %arg4, %arg1 : i32, i32, i32, i32, i32
  }
}

</mosaic_0001>

<llo_original>
// kernel: tpu_custom_call.1
$region0: #{tpu_custom_call.1}
  #allocation0 [shape = 'u32[]', space=smem, size = 0x4, offset = 0x4, fixed_abs, tag = 'smem constant byte address 0x4 - core index']
  #allocation1 [shape = 'u32[144,128]{1,0:T(1,128)}', space=vmem, size = 0x12000, scoped, tag = 'internal scratch']
  %s0 = inlined_call_operand.vmem [shape: f32[1,2,10,1,1,1,80,12], index: 0, kind: input, shape index: {}]
  %s1 = inlined_call_operand.vmem [shape: f32[1,9,12,128], index: 1, kind: input, shape index: {}]
  %s2 = inlined_call_operand.vmem [shape: f32[1,1,128], index: 2, kind: input, shape index: {}]
  %s3 = inlined_call_operand.hbm [shape: f32[1,2,8,64,128], index: 3, kind: output, shape index: {}]
  %s4 = sld [smem:[#allocation0]]
  $region53: #{tpu_custom_call.1} parent=0
    _
  %s6 = ssub.s32 1, %s4
  %s7 = scalar_select 0, %s6, %s4
  $region1: #{tpu_custom_call.1} parent=0
    #allocation2 [shape = 'u8[65536]{0}', space=vmem, size = 0x10000, scoped, tag = 'output window, operand 0']
    #allocation3 [shape = 's32[2]{0}', space=sflag, size = 0x8, scoped, tag = 'scoped memory for tpu_custom_call.1']
    %8 = vsyncpa [#allocation3], 0
    %s9 = scalar_lea.sflag [#allocation3], 1
    %10 = vsyncpa %s9, 0
    loop: start=0, step=1, limit=50
    $region2: #{tpu_custom_call.1} parent=1 // loop_pre_header
      _
    $region3: #{tpu_custom_call.1} parent=1 // loop_header
      %s12 = sphi 0, %s16
      %p13 = scmp.ge.s32.totalorder %s12, 50
      %s19 = sphi 0, %s59
      %s20 = sphi 0, %s55
      %s21 = sphi 0, %s51
      %s22 = sphi 0, %s47
      %s23 = sphi 0, %s43
      %s24 = sphi 0, %s39
      %s25 = sphi 0, %s19
      %s26 = sphi 0, %s20
      %s27 = sphi 0, %s21
      %s28 = sphi 0, %s22
      %s29 = sphi 0, %s23
      %s30 = sphi 0, %s24
      %s31 = sphi 0, %s25
      %s32 = sphi 0, %s26
      %s33 = sphi 0, %s27
      %s34 = sphi 0, %s28
      %s35 = sphi 0, %s29
      %s36 = sphi 0, %s30
      %s70 = sphi 0, %s72
      %s73 = sphi 0, %s70
      %s74 = sphi 0, %s73
      %s90 = sphi 0, %s74
      %s98 = sphi 0, %s100
      %s101 = sphi 0, %s98
      %s102 = sphi 0, %s101
      %s118 = sphi 0, %s102
      %s126 = sphi 0, %s128
      %s129 = sphi 0, %s126
      %s130 = sphi 0, %s129
      %s146 = sphi 0, %s130
      %s160 = sphi 0, %s162
      %s163 = sphi 0, %s160
      %s164 = sphi 0, %s163
      %s180 = sphi 0, %s164
    $region4: #{tpu_custom_call.1} parent=1 // loop_header_branch
      %15 = sbr.rel (%p13) target = $region8
    $region5: #{tpu_custom_call.1} parent=1 // loop_body
      %s17 = ssub.s32 %s12, 1
      %s18 = ssub.s32 %s12, 2
      %s37 = sadd.s32 1, %s24
      %p38 = scmp.ge.s32.totalorder %s37, 3
      %s39 = scalar_select %p38, 0, %s37
      %s40 = sadd.s32 1, %s23
      %s41 = scalar_select %p38, %s40, %s23
      %p42 = scmp.ge.s32.totalorder %s41, 1
      %s43 = scalar_select %p42, 0, %s41
      %s44 = sadd.s32 1, %s22
      %s45 = scalar_select %p42, %s44, %s22
      %p46 = scmp.ge.s32.totalorder %s45, 8
      %s47 = scalar_select %p46, 0, %s45
      %s48 = sadd.s32 1, %s21
      %s49 = scalar_select %p46, %s48, %s21
      %p50 = scmp.ge.s32.totalorder %s49, 2
      %s51 = scalar_select %p50, 0, %s49
      %s52 = sadd.s32 1, %s20
      %s53 = scalar_select %p50, %s52, %s20
      %p54 = scmp.ge.s32.totalorder %s53, 1
      %s55 = scalar_select %p54, 0, %s53
      %s56 = sadd.s32 1, %s19
      %s57 = scalar_select %p54, %s56, %s19
      %p58 = scmp.ge.s32.totalorder %s57, 1
      %s59 = scalar_select %p58, 0, %s57
      %s60 = sadd.s32 %s22, %s24
      %s61 = sadd.s32 %s47, %s39
      %s62 = ssub.s32 %s19, %s59
      %s63 = ssub.s32 %s21, %s51
      %s64 = sor.u32 %s62, %s63
      %s65 = ssub.s32 %s60, %s61
      %s66 = sor.u32 %s64, %s65
      %s67 = ssub.s32 %s23, %s43
      %s68 = sor.u32 %s66, %s67
      %p69 = scmp.eq.s32.totalorder %s68, 0
      %s71 = sadd.s32 %s70, 1
      %s72 = scalar_select %p69, %s70, %s71
      %p75 = pneg %p69
      %p76 = scmp.eq.s32.totalorder %s12, 47
      %p77 = por %p75, %p76
      %p78 = scmp.ne.s32.totalorder %s70, %s73
      %p79 = scmp.eq.s32.totalorder %s12, 0
      %p80 = por %p78, %p79
      %p81 = scmp.ne.s32.totalorder %s70, %s73
      %p82 = scmp.eq.s32.totalorder %s17, 47
      %p83 = por %p81, %p82
      %p84 = scmp.ne.s32.totalorder %s73, %s74
      %p85 = scmp.eq.s32.totalorder %s17, 0
      %p86 = por %p84, %p85
      %p87 = scmp.ne.s32.totalorder %s73, %s74
      %p88 = scmp.eq.s32.totalorder %s18, 47
      %p89 = por %p87, %p88
      %p91 = scmp.ne.s32.totalorder %s74, %s90
      %p92 = scmp.eq.s32.totalorder %s18, 0
      %p93 = por %p91, %p92
      %s94 = ssub.s32 %s19, %s59
      %s95 = ssub.s32 %s20, %s55
      %s96 = sor.u32 %s94, %s95
      %p97 = scmp.eq.s32.totalorder %s96, 0
      %s99 = sadd.s32 %s98, 1
      %s100 = scalar_select %p97, %s98, %s99
      %p103 = pneg %p97
      %p104 = scmp.eq.s32.totalorder %s12, 47
      %p105 = por %p103, %p104
      %p106 = scmp.ne.s32.totalorder %s98, %s101
      %p107 = scmp.eq.s32.totalorder %s12, 0
      %p108 = por %p106, %p107
      %p109 = scmp.ne.s32.totalorder %s98, %s101
      %p110 = scmp.eq.s32.totalorder %s17, 47
      %p111 = por %p109, %p110
      %p112 = scmp.ne.s32.totalorder %s101, %s102
      %p113 = scmp.eq.s32.totalorder %s17, 0
      %p114 = por %p112, %p113
      %p115 = scmp.ne.s32.totalorder %s101, %s102
      %p116 = scmp.eq.s32.totalorder %s18, 47
      %p117 = por %p115, %p116
      %p119 = scmp.ne.s32.totalorder %s102, %s118
      %p120 = scmp.eq.s32.totalorder %s18, 0
      %p121 = por %p119, %p120
      %s122 = ssub.s32 %s19, %s59
      %s123 = ssub.s32 %s20, %s55
      %s124 = sor.u32 %s122, %s123
      %p125 = scmp.eq.s32.totalorder %s124, 0
      %s127 = sadd.s32 %s126, 1
      %s128 = scalar_select %p125, %s126, %s127
      %p131 = pneg %p125
      %p132 = scmp.eq.s32.totalorder %s12, 47
      %p133 = por %p131, %p132
      %p134 = scmp.ne.s32.totalorder %s126, %s129
      %p135 = scmp.eq.s32.totalorder %s12, 0
      %p136 = por %p134, %p135
      %p137 = scmp.ne.s32.totalorder %s126, %s129
      %p138 = scmp.eq.s32.totalorder %s17, 47
      %p139 = por %p137, %p138
      %p140 = scmp.ne.s32.totalorder %s129, %s130
      %p141 = scmp.eq.s32.totalorder %s17, 0
      %p142 = por %p140, %p141
      %p143 = scmp.ne.s32.totalorder %s129, %s130
      %p144 = scmp.eq.s32.totalorder %s18, 47
      %p145 = por %p143, %p144
      %p147 = scmp.ne.s32.totalorder %s130, %s146
      %p148 = scmp.eq.s32.totalorder %s18, 0
      %p149 = por %p147, %p148
      %s150 = ssub.s32 %s19, %s59
      %s151 = ssub.s32 %s21, %s51
      %s152 = sor.u32 %s150, %s151
      %s153 = ssub.s32 %s22, %s47
      %s154 = sor.u32 %s152, %s153
      %s155 = ssub.s32 %s23, %s43
      %s156 = sor.u32 %s154, %s155
      %s157 = ssub.s32 %s20, %s55
      %s158 = sor.u32 %s156, %s157
      %p159 = scmp.eq.s32.totalorder %s158, 0
      %s161 = sadd.s32 %s160, 1
      %s162 = scalar_select %p159, %s160, %s161
      %p165 = pneg %p159
      %p166 = scmp.eq.s32.totalorder %s12, 47
      %p167 = por %p165, %p166
      %p168 = scmp.ne.s32.totalorder %s160, %s163
      %p169 = scmp.eq.s32.totalorder %s12, 0
      %p170 = por %p168, %p169
      %p171 = scmp.ne.s32.totalorder %s160, %s163
      %p172 = scmp.eq.s32.totalorder %s17, 47
      %p173 = por %p171, %p172
      %p174 = scmp.ne.s32.totalorder %s163, %s164
      %p175 = scmp.eq.s32.totalorder %s17, 0
      %p176 = por %p174, %p175
      %p177 = scmp.ne.s32.totalorder %s163, %s164
      %p178 = scmp.eq.s32.totalorder %s18, 47
      %p179 = por %p177, %p178
      %p181 = scmp.ne.s32.totalorder %s164, %s180
      %p182 = scmp.eq.s32.totalorder %s18, 0
      %p183 = por %p181, %p182
      %p184 = scmp.le.s32.totalorder 1, %s12
      %p185 = scmp.lt.s32.totalorder %s12, 49
      %p186 = pnand %p184, %p185
      %p187 = pneg %p186
      // Predicated region
      $region9: #{tpu_custom_call.1} parent=5 // pred_check
        _
      $region10: #{tpu_custom_call.1} parent=5 // pred_check_branch
        %189 = sbr.rel (%p186) target = $region12
      $region11: #{tpu_custom_call.1} parent=5 // pred_region
        %s190 = ssub.s32 %s12, 1
        // Predicated region
        $region13: #{tpu_custom_call.1} parent=11 // pred_check
          %p191 = pneg %p114
        $region14: #{tpu_custom_call.1} parent=11 // pred_check_branch
          %193 = sbr.rel (%p191) target = $region16
        $region15: #{tpu_custom_call.1} parent=11 // pred_region
          %p194 = scmp.lt.s32.totalorder %s25, 0
          %s195 = scalar_select %p194, %s25, 0
          %p196 = scmp.lt.s32.totalorder %s26, 0
          %s197 = scalar_select %p196, %s26, 0
          %s198 = smul.addr %s195, 18
          %s199 = sadd.s32 %s197, %s198
          %s200 = smul.addr %s199, 8
          %s201 = scalar_lea.vmem %s1, %s200
        $region16: #{tpu_custom_call.1} parent=11 // pred_fallthru
          _
        // Predicated region
        $region17: #{tpu_custom_call.1} parent=11 // pred_check
          %p202 = pneg %p142
        $region18: #{tpu_custom_call.1} parent=11 // pred_check_branch
          %204 = sbr.rel (%p202) target = $region20
        $region19: #{tpu_custom_call.1} parent=11 // pred_region
          %p205 = scmp.lt.s32.totalorder %s25, 0
          %s206 = scalar_select %p205, %s25, 0
          %p207 = scmp.lt.s32.totalorder %s26, 0
          %s208 = scalar_select %p207, %s26, 0
          %s209 = sadd.s32 %s208, %s206
          %s210 = scalar_lea.vmem %s2, %s209
        $region20: #{tpu_custom_call.1} parent=11 // pred_fallthru
          _
      $region12: #{tpu_custom_call.1} parent=5 // pred_fallthru
        _
      %p211 = scmp.lt.s32.totalorder %s12, 48
      // Predicated region
      $region21: #{tpu_custom_call.1} parent=5 // pred_check
        %p212 = pneg %p211
      $region22: #{tpu_custom_call.1} parent=5 // pred_check_branch
        %214 = sbr.rel (%p212) target = $region24
      $region23: #{tpu_custom_call.1} parent=5 // pred_region
        // Predicated region
        $region25: #{tpu_custom_call.1} parent=23 // pred_check
          %p215 = pneg %p80
        $region26: #{tpu_custom_call.1} parent=23 // pred_check_branch
          %217 = sbr.rel (%p215) target = $region28
        $region27: #{tpu_custom_call.1} parent=23 // pred_region
          %s218 = sadd.s32 %s22, %s24
          %p219 = scmp.lt.s32.totalorder %s19, 0
          %s220 = scalar_select %p219, %s19, 0
          %p221 = scmp.lt.s32.totalorder %s21, 1
          %s222 = scalar_select %p221, %s21, 1
          %p223 = scmp.lt.s32.totalorder %s218, 9
          %s224 = scalar_select %p223, %s218, 9
          %p225 = scmp.lt.s32.totalorder %s23, 0
          %s226 = scalar_select %p225, %s23, 0
          %s227 = smul.addr %s226, 10
          %s228 = smul.addr %s224, 10
          %s229 = sadd.s32 %s227, %s228
          %s230 = smul.addr %s222, 100
          %s231 = sadd.s32 %s229, %s230
          %s232 = smul.addr %s220, 200
          %s233 = sadd.s32 %s231, %s232
          %s234 = smul.addr %s233, 8
          %s235 = scalar_lea.vmem %s0, %s234
          %s236 = sadd.s32 %s22, %s24
        $region28: #{tpu_custom_call.1} parent=23 // pred_fallthru
          _
      $region24: #{tpu_custom_call.1} parent=5 // pred_fallthru
        _
      %p237 = scmp.le.s32.totalorder 1, %s12
      %p238 = scmp.lt.s32.totalorder %s12, 49
      %p239 = pnand %p237, %p238
      %p240 = pneg %p239
      // Predicated region
      $region29: #{tpu_custom_call.1} parent=5 // pred_check
        _
      $region30: #{tpu_custom_call.1} parent=5 // pred_check_branch
        %242 = sbr.rel (%p239) target = $region32
      $region31: #{tpu_custom_call.1} parent=5 // pred_region
        %s243 = ssub.s32 %s12, 1
        %s244 = sadd.s32 %s28, %s30
        %p245 = scmp.lt.s32.totalorder %s25, 0
        %s246 = scalar_select %p245, %s25, 0
        %p247 = scmp.lt.s32.totalorder %s27, 1
        %s248 = scalar_select %p247, %s27, 1
        %p249 = scmp.lt.s32.totalorder %s244, 9
        %s250 = scalar_select %p249, %s244, 9
        %p251 = scmp.lt.s32.totalorder %s29, 0
        %s252 = scalar_select %p251, %s29, 0
        %s253 = smul.addr %s252, 10
        %s254 = smul.addr %s250, 10
        %s255 = sadd.s32 %s253, %s254
        %s256 = smul.addr %s248, 100
        %s257 = sadd.s32 %s255, %s256
        %s258 = smul.addr %s246, 200
        %s259 = sadd.s32 %s257, %s258
        %s260 = smul.addr %s259, 8
        %s261 = scalar_lea.vmem %s0, %s260
        %p262 = pneg %p86
        %p263 = pneg %p83
        %p264 = scmp.lt.s32.totalorder %s25, 0
        %s265 = scalar_select %p264, %s25, 0
        %p266 = scmp.lt.s32.totalorder %s26, 0
        %s267 = scalar_select %p266, %s26, 0
        %s268 = smul.addr %s265, 18
        %s269 = sadd.s32 %s267, %s268
        %s270 = smul.addr %s269, 8
        %s271 = scalar_lea.vmem %s1, %s270
        %p272 = pneg %p114
        %p273 = pneg %p111
        %p274 = scmp.lt.s32.totalorder %s25, 0
        %s275 = scalar_select %p274, %s25, 0
        %p276 = scmp.lt.s32.totalorder %s26, 0
        %s277 = scalar_select %p276, %s26, 0
        %s278 = sadd.s32 %s277, %s275
        %s279 = scalar_lea.vmem %s2, %s278
        %p280 = pneg %p142
        %p281 = pneg %p139
        %p282 = pneg %p176
        %p283 = pneg %p173
        %s284 = sand.u32 %s163, 1
        %s285 = scalar_lea.sflag [#allocation3], %s284
        %s286 = sand.u32 %s163, 1
        %s287 = smul.addr %s286, 64
        %s288 = scalar_lea.vmem [#allocation2], %s287
        %s289 = sadd.s32 %s28, %s30
        %p290 = scmp.lt.s32.totalorder %s25, 0
        %s291 = scalar_select %p290, %s25, 0
        %p292 = scmp.lt.s32.totalorder %s27, 1
        %s293 = scalar_select %p292, %s27, 1
        %p294 = scmp.lt.s32.totalorder %s289, 9
        %s295 = scalar_select %p294, %s289, 9
        %p296 = scmp.lt.s32.totalorder %s29, 0
        %s297 = scalar_select %p296, %s29, 0
        %s298 = smul.addr %s297, 10
        %s299 = smul.addr %s295, 10
        %s300 = sadd.s32 %s298, %s299
        %s301 = smul.addr %s293, 100
        %s302 = sadd.s32 %s300, %s301
        %s303 = smul.addr %s291, 200
        %s304 = sadd.s32 %s302, %s303
        %s305 = smul.addr %s304, 8
        %s306 = scalar_lea.vmem %s0, %s305
        %s307 = sadd.s32 %s28, %s30
        %p308 = scmp.lt.s32.totalorder %s25, 0
        %s309 = scalar_select %p308, %s25, 0
        %p310 = scmp.lt.s32.totalorder %s26, 0
        %s311 = scalar_select %p310, %s26, 0
        %s312 = smul.addr %s309, 18
        %s313 = sadd.s32 %s311, %s312
        %s314 = smul.addr %s313, 8
        %s315 = scalar_lea.vmem %s1, %s314
        %p316 = scmp.lt.s32.totalorder %s25, 0
        %s317 = scalar_select %p316, %s25, 0
        %p318 = scmp.lt.s32.totalorder %s26, 0
        %s319 = scalar_select %p318, %s26, 0
        %s320 = sadd.s32 %s319, %s317
        %s321 = scalar_lea.vmem %s2, %s320
        %s322 = smul.u32 8, %s29
        %v323 = vld [vmem:[%s306] sm:$0xff]
        %v324 = vld [vmem:[%s306 + $0x8] sm:$0xff]
        %v325 = vld [vmem:[%s306 + $0x10] sm:$0xff]
        %v326 = vld [vmem:[%s306 + $0x18] sm:$0xff]
        %v327 = vld [vmem:[%s306 + $0x20] sm:$0xff]
        %v328 = vld [vmem:[%s306 + $0x28] sm:$0xff]
        %v329 = vld [vmem:[%s306 + $0x30] sm:$0xff]
        %v330 = vld [vmem:[%s306 + $0x38] sm:$0xff]
        %s331 = smul.u32 %s30, 3
        %s332 = smul.u32 %s331, 16
        %s333 = scalar_lea.vmem %s315, %s332
        %v334 = vld [vmem:[%s333] sm:$0xff]
        %v335 = vld [vmem:[%s333 + $0x8] sm:$0xf]
        %v336 = vld [vmem:[%s306 + $0x40] sm:$0xff]
        %s337 = sadd.s32 %s331, 1
        %s338 = smul.u32 %s337, 16
        %s339 = scalar_lea.vmem %s315, %s338
        %v340 = vld [vmem:[%s339] sm:$0xff]
        %v341 = vld [vmem:[%s339 + $0x8] sm:$0xf]
        %vm342 = vcmask 97280
        %v344 = vsel %vm342, %v324, 0
        %v347 = vsel %vm342, %v325, 0
        %v350 = vsel %vm342, %v326, 0
        %v353 = vsel %vm342, %v327, 0
        %v356 = vsel %vm342, %v328, 0
        %v359 = vsel %vm342, %v329, 0
        %v362 = vsel %vm342, %v330, 0
        %v365 = vsel %vm342, %v336, 0
        %vm367 = vcmask 1043456
        %v369 = vsel %vm367, %v341, 0
        %371 = vmatprep.subr.mxu0 0.0
        %372 = vmatpush1.msra.mxu0 0.0
        %373 = vmatprep.subr.mxu0 0.0
        %374 = vmatpush1.msra.mxu0 0.0
        %375 = vmatprep.subr.mxu0 0.0
        %376 = vmatpush1.msra.mxu0 0.0
        %377 = vmatprep.subr.mxu0 0.0
        %378 = vmatpush1.msra.mxu0 0.0
        %379 = vmatprep.subr.mxu0 0.0
        %380 = vmatpush1.msra.mxu0 0.0
        %381 = vmatprep.subr.mxu0 0.0
        %382 = vmatpush1.msra.mxu0 0.0
        %383 = vmatprep.subr.mxu0 0.0
        %384 = vmatpush1.msra.mxu0 0.0
        %385 = vmatprep.subr.mxu0 0.0
        %386 = vmatpush1.msra.mxu0 0.0
        %387 = vmatprep.subr.mxu0 0.0
        %388 = vmatpush1.msra.mxu0 0.0
        %389 = vmatprep.subr.mxu0 0.0
        %390 = vmatpush1.msra.mxu0 0.0
        %391 = vmatprep.subr.mxu0 0.0
        %392 = vmatpush1.msra.mxu0 0.0
        %393 = vmatprep.subr.mxu0 0.0
        %394 = vmatpush1.msra.mxu0 0.0
        %395 = vmatprep.subr.mxu0 0.0
        %396 = vmatpush1.msra.mxu0 0.0
        %397 = vmatprep.subr.mxu0 0.0
        %398 = vmatpush1.msra.mxu0 0.0
        %399 = vmatprep.subr.mxu0 0.0
        %400 = vmatpush1.msra.mxu0 %v369
        %401 = vmatprep.subr.mxu0 0.0
        %402 = vmatpush1.msra.mxu0 %v340
        %403 = vmatprep.subr.mxu0 0.0
        %404 = vmatpush2.msra.mxu0 0.0
        %405 = vmatprep.subr.mxu0 0.0
        %406 = vmatpush2.msra.mxu0 0.0
        %407 = vmatprep.subr.mxu0 0.0
        %408 = vmatpush2.msra.mxu0 0.0
        %409 = vmatprep.subr.mxu0 0.0
        %410 = vmatpush2.msra.mxu0 0.0
        %411 = vmatprep.subr.mxu0 0.0
        %412 = vmatpush2.msra.mxu0 0.0
        %413 = vmatprep.subr.mxu0 0.0
        %414 = vmatpush2.msra.mxu0 0.0
        %415 = vmatprep.subr.mxu0 0.0
        %416 = vmatpush2.msra.mxu0 0.0
        %417 = vmatprep.subr.mxu0 0.0
        %418 = vmatpush2.msra.mxu0 0.0
        %419 = vmatprep.subr.mxu0 0.0
        %420 = vmatpush2.msra.mxu0 0.0
        %421 = vmatprep.subr.mxu0 0.0
        %422 = vmatpush2.msra.mxu0 0.0
        %423 = vmatprep.subr.mxu0 0.0
        %424 = vmatpush2.msra.mxu0 0.0
        %425 = vmatprep.subr.mxu0 0.0
        %426 = vmatpush2.msra.mxu0 0.0
        %427 = vmatprep.subr.mxu0 0.0
        %428 = vmatpush2.msra.mxu0 0.0
        %429 = vmatprep.subr.mxu0 0.0
        %430 = vmatpush2.msra.mxu0 0.0
        %431 = vmatprep.subr.mxu0 0.0
        %432 = vmatpush2.msra.mxu0 0.0
        %433 = vmatprep.subr.mxu0 0.0
        %434 = vmatpush2.msra.mxu0 0.0
        %435 = vmatprep.mubr.f32.mxu0 0.0
        %436 = vmatmul.mubr.f32.gmra.mxu0 %v344
        %v437 = vpop.f32.mrf.mxu0
        %v438 = vadd.f32 0.0, %v437
        %v439 = vpop.f32.mrf.mxu0
        %440 = vmatprep.mubr.f32.mxu0 0.0
        %441 = vmatmul.mubr.f32.gmra.mxu0 %v347
        %v442 = vpop.f32.mrf.mxu0
        %v443 = vadd.f32 0.0, %v442
        %v444 = vpop.f32.mrf.mxu0
        %445 = vmatprep.mubr.f32.mxu0 0.0
        %446 = vmatmul.mubr.f32.gmra.mxu0 %v350
        %v447 = vpop.f32.mrf.mxu0
        %v448 = vadd.f32 0.0, %v447
        %v449 = vpop.f32.mrf.mxu0
        %450 = vmatprep.mubr.f32.mxu0 0.0
        %451 = vmatmul.mubr.f32.gmra.mxu0 %v353
        %v452 = vpop.f32.mrf.mxu0
        %v453 = vadd.f32 0.0, %v452
        %v454 = vpop.f32.mrf.mxu0
        %455 = vmatprep.mubr.f32.mxu0 0.0
        %456 = vmatmul.mubr.f32.gmra.mxu0 %v356
        %v457 = vpop.f32.mrf.mxu0
        %v458 = vadd.f32 0.0, %v457
        %v459 = vpop.f32.mrf.mxu0
        %460 = vmatprep.mubr.f32.mxu0 0.0
        %461 = vmatmul.mubr.f32.gmra.mxu0 %v359
        %v462 = vpop.f32.mrf.mxu0
        %v463 = vadd.f32 0.0, %v462
        %v464 = vpop.f32.mrf.mxu0
        %465 = vmatprep.mubr.f32.mxu0 0.0
        %466 = vmatmul.mubr.f32.gmra.mxu0 %v362
        %v467 = vpop.f32.mrf.mxu0
        %v468 = vadd.f32 0.0, %v467
        %v469 = vpop.f32.mrf.mxu0
        %470 = vmatprep.mubr.f32.mxu0 0.0
        %471 = vmatmul.mubr.f32.gmra.mxu0 %v365
        %v472 = vpop.f32.mrf.mxu0
        %v473 = vadd.f32 0.0, %v472
        %v474 = vpop.f32.mrf.mxu0
        %475 = vdwg.mxu0
        %v477 = vsel %vm342, %v323, 0
        %v480 = vsel %vm367, %v335, 0
        %482 = vmatprep.subr.mxu0 0.0
        %483 = vmatpush1.msra.mxu0 0.0
        %484 = vmatprep.subr.mxu0 0.0
        %485 = vmatpush1.msra.mxu0 0.0
        %486 = vmatprep.subr.mxu0 0.0
        %487 = vmatpush1.msra.mxu0 0.0
        %488 = vmatprep.subr.mxu0 0.0
        %489 = vmatpush1.msra.mxu0 0.0
        %490 = vmatprep.subr.mxu0 0.0
        %491 = vmatpush1.msra.mxu0 0.0
        %492 = vmatprep.subr.mxu0 0.0
        %493 = vmatpush1.msra.mxu0 0.0
        %494 = vmatprep.subr.mxu0 0.0
        %495 = vmatpush1.msra.mxu0 0.0
        %496 = vmatprep.subr.mxu0 0.0
        %497 = vmatpush1.msra.mxu0 0.0
        %498 = vmatprep.subr.mxu0 0.0
        %499 = vmatpush1.msra.mxu0 0.0
        %500 = vmatprep.subr.mxu0 0.0
        %501 = vmatpush1.msra.mxu0 0.0
        %502 = vmatprep.subr.mxu0 0.0
        %503 = vmatpush1.msra.mxu0 0.0
        %504 = vmatprep.subr.mxu0 0.0
        %505 = vmatpush1.msra.mxu0 0.0
        %506 = vmatprep.subr.mxu0 0.0
        %507 = vmatpush1.msra.mxu0 0.0
        %508 = vmatprep.subr.mxu0 0.0
        %509 = vmatpush1.msra.mxu0 0.0
        %510 = vmatprep.subr.mxu0 0.0
        %511 = vmatpush1.msra.mxu0 %v480
        %512 = vmatprep.subr.mxu0 0.0
        %513 = vmatpush1.msra.mxu0 %v334
        %514 = vmatprep.subr.mxu0 0.0
        %515 = vmatpush2.msra.mxu0 0.0
        %516 = vmatprep.subr.mxu0 0.0
        %517 = vmatpush2.msra.mxu0 0.0
        %518 = vmatprep.subr.mxu0 0.0
        %519 = vmatpush2.msra.mxu0 0.0
        %520 = vmatprep.subr.mxu0 0.0
        %521 = vmatpush2.msra.mxu0 0.0
        %522 = vmatprep.subr.mxu0 0.0
        %523 = vmatpush2.msra.mxu0 0.0
        %524 = vmatprep.subr.mxu0 0.0
        %525 = vmatpush2.msra.mxu0 0.0
        %526 = vmatprep.subr.mxu0 0.0
        %527 = vmatpush2.msra.mxu0 0.0
        %528 = vmatprep.subr.mxu0 0.0
        %529 = vmatpush2.msra.mxu0 0.0
        %530 = vmatprep.subr.mxu0 0.0
        %531 = vmatpush2.msra.mxu0 0.0
        %532 = vmatprep.subr.mxu0 0.0
        %533 = vmatpush2.msra.mxu0 0.0
        %534 = vmatprep.subr.mxu0 0.0
        %535 = vmatpush2.msra.mxu0 0.0
        %536 = vmatprep.subr.mxu0 0.0
        %537 = vmatpush2.msra.mxu0 0.0
        %538 = vmatprep.subr.mxu0 0.0
        %539 = vmatpush2.msra.mxu0 0.0
        %540 = vmatprep.subr.mxu0 0.0
        %541 = vmatpush2.msra.mxu0 0.0
        %542 = vmatprep.subr.mxu0 0.0
        %543 = vmatpush2.msra.mxu0 0.0
        %544 = vmatprep.subr.mxu0 0.0
        %545 = vmatpush2.msra.mxu0 0.0
        %546 = vmatprep.mubr.f32.mxu0 0.0
        %547 = vmatmul.mubr.f32.gmra.mxu0 %v477
        %v548 = vpop.f32.mrf.mxu0
        %v549 = vadd.f32 %v438, %v548
        %v550 = vpop.f32.mrf.mxu0
        %551 = vmatprep.mubr.f32.mxu0 0.0
        %552 = vmatmul.mubr.f32.gmra.mxu0 %v344
        %v553 = vpop.f32.mrf.mxu0
        %v554 = vadd.f32 %v443, %v553
        %v555 = vpop.f32.mrf.mxu0
        %556 = vmatprep.mubr.f32.mxu0 0.0
        %557 = vmatmul.mubr.f32.gmra.mxu0 %v347
        %v558 = vpop.f32.mrf.mxu0
        %v559 = vadd.f32 %v448, %v558
        %v560 = vpop.f32.mrf.mxu0
        %561 = vmatprep.mubr.f32.mxu0 0.0
        %562 = vmatmul.mubr.f32.gmra.mxu0 %v350
        %v563 = vpop.f32.mrf.mxu0
        %v564 = vadd.f32 %v453, %v563
        %v565 = vpop.f32.mrf.mxu0
        %566 = vmatprep.mubr.f32.mxu0 0.0
        %567 = vmatmul.mubr.f32.gmra.mxu0 %v353
        %v568 = vpop.f32.mrf.mxu0
        %v569 = vadd.f32 %v458, %v568
        %v570 = vpop.f32.mrf.mxu0
        %571 = vmatprep.mubr.f32.mxu0 0.0
        %572 = vmatmul.mubr.f32.gmra.mxu0 %v356
        %v573 = vpop.f32.mrf.mxu0
        %v574 = vadd.f32 %v463, %v573
        %v575 = vpop.f32.mrf.mxu0
        %576 = vmatprep.mubr.f32.mxu0 0.0
        %577 = vmatmul.mubr.f32.gmra.mxu0 %v359
        %v578 = vpop.f32.mrf.mxu0
        %v579 = vadd.f32 %v468, %v578
        %v580 = vpop.f32.mrf.mxu0
        %581 = vmatprep.mubr.f32.mxu0 0.0
        %582 = vmatmul.mubr.f32.gmra.mxu0 %v362
        %v583 = vpop.f32.mrf.mxu0
        %v584 = vadd.f32 %v473, %v583
        %v585 = vpop.f32.mrf.mxu0
        %586 = vdwg.mxu0
        %v587 = vld [vmem:[%s306 + $0x10] sm:$0xff]
        %v588 = vld [vmem:[%s306 + $0x18] sm:$0xff]
        %v589 = vld [vmem:[%s306 + $0x20] sm:$0xff]
        %v590 = vld [vmem:[%s306 + $0x28] sm:$0xff]
        %v591 = vld [vmem:[%s306 + $0x30] sm:$0xff]
        %v592 = vld [vmem:[%s306 + $0x38] sm:$0xff]
        %v593 = vld [vmem:[%s306 + $0x40] sm:$0xff]
        %v594 = vld [vmem:[%s306 + $0x48] sm:$0xff]
        %s595 = sadd.s32 %s331, 2
        %s596 = smul.u32 %s595, 16
        %s597 = scalar_lea.vmem %s315, %s596
        %v598 = vld [vmem:[%s597] sm:$0xff]
        %v599 = vld [vmem:[%s597 + $0x8] sm:$0xf]
        %v601 = vsel %vm342, %v587, 0
        %v604 = vsel %vm342, %v588, 0
        %v607 = vsel %vm342, %v589, 0
        %v610 = vsel %vm342, %v590, 0
        %v613 = vsel %vm342, %v591, 0
        %v616 = vsel %vm342, %v592, 0
        %v619 = vsel %vm342, %v593, 0
        %v622 = vsel %vm342, %v594, 0
        %v625 = vsel %vm367, %v599, 0
        %627 = vmatprep.subr.mxu0 0.0
        %628 = vmatpush1.msra.mxu0 0.0
        %629 = vmatprep.subr.mxu0 0.0
        %630 = vmatpush1.msra.mxu0 0.0
        %631 = vmatprep.subr.mxu0 0.0
        %632 = vmatpush1.msra.mxu0 0.0
        %633 = vmatprep.subr.mxu0 0.0
        %634 = vmatpush1.msra.mxu0 0.0
        %635 = vmatprep.subr.mxu0 0.0
        %636 = vmatpush1.msra.mxu0 0.0
        %637 = vmatprep.subr.mxu0 0.0
        %638 = vmatpush1.msra.mxu0 0.0
        %639 = vmatprep.subr.mxu0 0.0
        %640 = vmatpush1.msra.mxu0 0.0
        %641 = vmatprep.subr.mxu0 0.0
        %642 = vmatpush1.msra.mxu0 0.0
        %643 = vmatprep.subr.mxu0 0.0
        %644 = vmatpush1.msra.mxu0 0.0
        %645 = vmatprep.subr.mxu0 0.0
        %646 = vmatpush1.msra.mxu0 0.0
        %647 = vmatprep.subr.mxu0 0.0
        %648 = vmatpush1.msra.mxu0 0.0
        %649 = vmatprep.subr.mxu0 0.0
        %650 = vmatpush1.msra.mxu0 0.0
        %651 = vmatprep.subr.mxu0 0.0
        %652 = vmatpush1.msra.mxu0 0.0
        %653 = vmatprep.subr.mxu0 0.0
        %654 = vmatpush1.msra.mxu0 0.0
        %655 = vmatprep.subr.mxu0 0.0
        %656 = vmatpush1.msra.mxu0 %v625
        %657 = vmatprep.subr.mxu0 0.0
        %658 = vmatpush1.msra.mxu0 %v598
        %659 = vmatprep.subr.mxu0 0.0
        %660 = vmatpush2.msra.mxu0 0.0
        %661 = vmatprep.subr.mxu0 0.0
        %662 = vmatpush2.msra.mxu0 0.0
        %663 = vmatprep.subr.mxu0 0.0
        %664 = vmatpush2.msra.mxu0 0.0
        %665 = vmatprep.subr.mxu0 0.0
        %666 = vmatpush2.msra.mxu0 0.0
        %667 = vmatprep.subr.mxu0 0.0
        %668 = vmatpush2.msra.mxu0 0.0
        %669 = vmatprep.subr.mxu0 0.0
        %670 = vmatpush2.msra.mxu0 0.0
        %671 = vmatprep.subr.mxu0 0.0
        %672 = vmatpush2.msra.mxu0 0.0
        %673 = vmatprep.subr.mxu0 0.0
        %674 = vmatpush2.msra.mxu0 0.0
        %675 = vmatprep.subr.mxu0 0.0
        %676 = vmatpush2.msra.mxu0 0.0
        %677 = vmatprep.subr.mxu0 0.0
        %678 = vmatpush2.msra.mxu0 0.0
        %679 = vmatprep.subr.mxu0 0.0
        %680 = vmatpush2.msra.mxu0 0.0
        %681 = vmatprep.subr.mxu0 0.0
        %682 = vmatpush2.msra.mxu0 0.0
        %683 = vmatprep.subr.mxu0 0.0
        %684 = vmatpush2.msra.mxu0 0.0
        %685 = vmatprep.subr.mxu0 0.0
        %686 = vmatpush2.msra.mxu0 0.0
        %687 = vmatprep.subr.mxu0 0.0
        %688 = vmatpush2.msra.mxu0 0.0
        %689 = vmatprep.subr.mxu0 0.0
        %690 = vmatpush2.msra.mxu0 0.0
        %691 = vmatprep.mubr.f32.mxu0 0.0
        %692 = vmatmul.mubr.f32.gmra.mxu0 %v601
        %v693 = vpop.f32.mrf.mxu0
        %v694 = vadd.f32 0.0, %v693
        %v695 = vpop.f32.mrf.mxu0
        %696 = vmatprep.mubr.f32.mxu0 0.0
        %697 = vmatmul.mubr.f32.gmra.mxu0 %v604
        %v698 = vpop.f32.mrf.mxu0
        %v699 = vadd.f32 0.0, %v698
        %v700 = vpop.f32.mrf.mxu0
        %701 = vmatprep.mubr.f32.mxu0 0.0
        %702 = vmatmul.mubr.f32.gmra.mxu0 %v607
        %v703 = vpop.f32.mrf.mxu0
        %v704 = vadd.f32 0.0, %v703
        %v705 = vpop.f32.mrf.mxu0
        %706 = vmatprep.mubr.f32.mxu0 0.0
        %707 = vmatmul.mubr.f32.gmra.mxu0 %v610
        %v708 = vpop.f32.mrf.mxu0
        %v709 = vadd.f32 0.0, %v708
        %v710 = vpop.f32.mrf.mxu0
        %711 = vmatprep.mubr.f32.mxu0 0.0
        %712 = vmatmul.mubr.f32.gmra.mxu0 %v613
        %v713 = vpop.f32.mrf.mxu0
        %v714 = vadd.f32 0.0, %v713
        %v715 = vpop.f32.mrf.mxu0
        %716 = vmatprep.mubr.f32.mxu0 0.0
        %717 = vmatmul.mubr.f32.gmra.mxu0 %v616
        %v718 = vpop.f32.mrf.mxu0
        %v719 = vadd.f32 0.0, %v718
        %v720 = vpop.f32.mrf.mxu0
        %721 = vmatprep.mubr.f32.mxu0 0.0
        %722 = vmatmul.mubr.f32.gmra.mxu0 %v619
        %v723 = vpop.f32.mrf.mxu0
        %v724 = vadd.f32 0.0, %v723
        %v725 = vpop.f32.mrf.mxu0
        %726 = vmatprep.mubr.f32.mxu0 0.0
        %727 = vmatmul.mubr.f32.gmra.mxu0 %v622
        %v728 = vpop.f32.mrf.mxu0
        %v729 = vadd.f32 0.0, %v728
        %v730 = vpop.f32.mrf.mxu0
        %731 = vdwg.mxu0
        %v732 = vadd.f32 %v549, %v694
        %v733 = vadd.f32 %v554, %v699
        %v734 = vadd.f32 %v559, %v704
        %v735 = vadd.f32 %v564, %v709
        %v736 = vadd.f32 %v569, %v714
        %v737 = vadd.f32 %v574, %v719
        %v738 = vadd.f32 %v579, %v724
        %v739 = vadd.f32 %v584, %v729
        %p740 = scmp.eq.s32.totalorder %s30, 0
        // Predicated region
        $region33: #{tpu_custom_call.1} parent=31 // pred_check
          %p741 = pneg %p740
        $region34: #{tpu_custom_call.1} parent=31 // pred_check_branch
          %743 = sbr.rel (%p741) target = $region36
        $region35: #{tpu_custom_call.1} parent=31 // pred_region
          %v744 = vld [vmem:[%s321] sm:$0x1]
          %v746 = vlaneseq
          %v747 = vshrl.u32 %v746, 7
          %v748 = vsub.s32 0, %v747
          %v749 = vrot.slane %v744, %v748
          %v751 = vadd.f32 %v732, %v749
          %v752 = vadd.f32 %v733, %v749
          %v753 = vadd.f32 %v734, %v749
          %v754 = vadd.f32 %v735, %v749
          %v755 = vadd.f32 %v736, %v749
          %v756 = vadd.f32 %v737, %v749
          %v757 = vadd.f32 %v738, %v749
          %v758 = vadd.f32 %v739, %v749
          %759 = vst [vmem:[%s288] sm:$0xff] %v751
          %760 = vst [vmem:[%s288 + $0x8] sm:$0xff] %v752
          %761 = vst [vmem:[%s288 + $0x10] sm:$0xff] %v753
          %762 = vst [vmem:[%s288 + $0x18] sm:$0xff] %v754
          %763 = vst [vmem:[%s288 + $0x20] sm:$0xff] %v755
          %764 = vst [vmem:[%s288 + $0x28] sm:$0xff] %v756
          %765 = vst [vmem:[%s288 + $0x30] sm:$0xff] %v757
          %766 = vst [vmem:[%s288 + $0x38] sm:$0xff] %v758
        $region36: #{tpu_custom_call.1} parent=31 // pred_fallthru
          _
        %p767 = scmp.gt.s32.totalorder %s30, 0
        // Predicated region
        $region37: #{tpu_custom_call.1} parent=31 // pred_check
          %p768 = pneg %p767
        $region38: #{tpu_custom_call.1} parent=31 // pred_check_branch
          %770 = sbr.rel (%p768) target = $region40
        $region39: #{tpu_custom_call.1} parent=31 // pred_region
          %v771 = vld [vmem:[%s288] sm:$0xff]
          %v772 = vld [vmem:[%s288 + $0x8] sm:$0xff]
          %v773 = vld [vmem:[%s288 + $0x10] sm:$0xff]
          %v774 = vld [vmem:[%s288 + $0x18] sm:$0xff]
          %v775 = vld [vmem:[%s288 + $0x20] sm:$0xff]
          %v776 = vld [vmem:[%s288 + $0x28] sm:$0xff]
          %v777 = vld [vmem:[%s288 + $0x30] sm:$0xff]
          %v778 = vld [vmem:[%s288 + $0x38] sm:$0xff]
          %v779 = vadd.f32 %v771, %v732
          %v780 = vadd.f32 %v772, %v733
          %v781 = vadd.f32 %v773, %v734
          %v782 = vadd.f32 %v774, %v735
          %v783 = vadd.f32 %v775, %v736
          %v784 = vadd.f32 %v776, %v737
          %v785 = vadd.f32 %v777, %v738
          %v786 = vadd.f32 %v778, %v739
          %787 = vst [vmem:[%s288] sm:$0xff] %v779
          %788 = vst [vmem:[%s288 + $0x8] sm:$0xff] %v780
          %789 = vst [vmem:[%s288 + $0x10] sm:$0xff] %v781
          %790 = vst [vmem:[%s288 + $0x18] sm:$0xff] %v782
          %791 = vst [vmem:[%s288 + $0x20] sm:$0xff] %v783
          %792 = vst [vmem:[%s288 + $0x28] sm:$0xff] %v784
          %793 = vst [vmem:[%s288 + $0x30] sm:$0xff] %v785
          %794 = vst [vmem:[%s288 + $0x38] sm:$0xff] %v786
        $region40: #{tpu_custom_call.1} parent=31 // pred_fallthru
          _
        %s795 = sand.u32 %s163, 1
        %s796 = scalar_lea.sflag [#allocation3], %s795
        %s797 = sand.u32 %s163, 1
        %s798 = smul.addr %s797, 64
        %s799 = scalar_lea.vmem [#allocation2], %s798
        // Predicated region
        $region41: #{tpu_custom_call.1} parent=31 // pred_check
          %p800 = pneg %p173
        $region42: #{tpu_custom_call.1} parent=31 // pred_check_branch
          %802 = sbr.rel (%p800) target = $region44
        $region43: #{tpu_custom_call.1} parent=31 // pred_region
          %s803 = smul.u32 8, %s29
          %s805 = ssub.s32 1024, 1024
          %806 = vsyncadd %s796, %s805
          %s807 = sadd.s32 %s26, %s803
          %s808 = smul.addr %s28, 8
          %s809 = sadd.s32 %s807, %s808
          %s810 = smul.addr %s27, 64
          %s811 = sadd.s32 %s809, %s810
          %s812 = smul.addr %s25, 128
          %s813 = sadd.s32 %s811, %s812
          %s814 = smul.addr %s813, 128
          %s815 = scalar_lea.hbm %s3, %s814
          %s816 = sshll.u32 %s799, 4
          %s817 = int_to_ptr.vmem [resolvable:$true] %s816
          %822 = dma.vmem_to_hbm [thread:$0]  %s817, 1024, %s815, %s796, 128, 128, 8
        $region44: #{tpu_custom_call.1} parent=31 // pred_fallthru
          _
      $region32: #{tpu_custom_call.1} parent=5 // pred_fallthru
        _
      %p823 = scmp.le.s32.totalorder 2, %s12
      // Predicated region
      $region45: #{tpu_custom_call.1} parent=5 // pred_check
        %p824 = pneg %p823
      $region46: #{tpu_custom_call.1} parent=5 // pred_check_branch
        %826 = sbr.rel (%p824) target = $region48
      $region47: #{tpu_custom_call.1} parent=5 // pred_region
        %s827 = ssub.s32 %s12, 2
        // Predicated region
        $region49: #{tpu_custom_call.1} parent=47 // pred_check
          %p828 = pneg %p179
        $region50: #{tpu_custom_call.1} parent=47 // pred_check_branch
          %830 = sbr.rel (%p828) target = $region52
        $region51: #{tpu_custom_call.1} parent=47 // pred_region
          %s831 = sand.u32 %s164, 1
          %s832 = scalar_lea.sflag [#allocation3], %s831
          %s833 = sand.u32 %s164, 1
          %s834 = smul.addr %s833, 64
          %s835 = scalar_lea.vmem [#allocation2], %s834
          %836 = dma.done %s832, 1024
        $region52: #{tpu_custom_call.1} parent=47 // pred_fallthru
          _
      $region48: #{tpu_custom_call.1} parent=5 // pred_fallthru
        _
    $region6: #{tpu_custom_call.1} parent=1 // loop_footer
      %s16 = sadd.s32 1, %s12
    $region7: #{tpu_custom_call.1} parent=1 // loop_footer_branch
      %11 = sbr.rel target = $region3
    $region8: #{tpu_custom_call.1} parent=1 // loop_exit
      _
    %837 = vsyncpa [#allocation3], 1
    %s838 = scalar_lea.sflag [#allocation3], 1
    %839 = vsyncpa %s838, 1

</llo_original>
